<compile_context>
chip_gen: v6e
topology: v6e:2x2x1
jax: 0.10.0
libtpu: 0.0.40
codegen_flags: <defaults>
</compile_context>

<pallas_src>
import jax
import jax.numpy as jnp
from jax.experimental import pallas as pl
from jax.experimental.pallas import tpu as pltpu

HIDDEN = 100
HIDDEN_PAD = 128     # one full 128-lane vreg
TILE_B_MAX = 1024    # 2x double-buffered (1024 x F) bf16 x-tile + resident weights
                     # + (1024 x 128) f32 hidden << 32 MiB scoped VMEM (v7x-safe)


def _round_up(n, m):
    return ((n + m - 1) // m) * m


def _two_layer_kernel(x_ref, w1_ref, b1_ref, w2_ref, b2_ref, o_ref):
    # Hidden layer: bf16 x @ bf16 W1 on the MXU, f32 accumulation.
    h = jnp.dot(x_ref[...], w1_ref[...], preferred_element_type=jnp.float32)
    # Bias add + ReLU in f32 (v5e VPU has no bf16 elementwise path).
    h = jnp.maximum(h + b1_ref[...], 0.0)
    # Output head: cast activations to bf16 for the second MXU matmul, f32 accum.
    out = jnp.dot(h.astype(w2_ref.dtype), w2_ref[...],
                  preferred_element_type=jnp.float32)
    # b2 is a (1,1) SMEM scalar.
    o_ref[...] = (out + b2_ref[0, 0]).astype(o_ref.dtype)


def two_layer_net(x, w1, b1, w2, b2):
    """x: [B, F] f32; w1: [F, 100]; b1: [1, 100]; w2: [100, 1]; b2: [1, 1]."""
    B, F = x.shape
    H = w1.shape[1]
    hp = HIDDEN_PAD

    b1 = jnp.reshape(b1, (1, H)).astype(jnp.float32)
    b2 = jnp.reshape(b2, (1, 1)).astype(jnp.float32)

    # Zero-pad hidden 100 -> 128. ReLU(0) = 0 and zero W2 rows contribute nothing,
    # so the result is mathematically unchanged.
    w1p = jnp.zeros((F, hp), jnp.bfloat16).at[:, :H].set(w1.astype(jnp.bfloat16))
    b1p = jnp.zeros((1, hp), jnp.float32).at[:, :H].set(b1)
    w2p = jnp.zeros((hp, 1), jnp.bfloat16).at[:H, :].set(w2.astype(jnp.bfloat16))

    # Batch tiling: per-grid-step overhead dominates tiny tiles, so use a big tile
    # (capped so it also fits v7x's smaller VMEM). Pad B so every tile is full;
    # padded rows are sliced off after the call (never observed).
    tile_b = min(TILE_B_MAX, _round_up(B, 8))
    b_pad = _round_up(B, tile_b)
    xb = x.astype(jnp.bfloat16)
    if b_pad != B:
        xb = jnp.pad(xb, ((0, b_pad - B), (0, 0)))

    cost = pl.CostEstimate(
        flops=2 * b_pad * (F * hp + hp),
        transcendentals=0,
        bytes_accessed=(b_pad * F * 2            # x (bf16)
                        + b_pad * 4              # out (f32)
                        + (F * hp + hp) * 2      # W1, W2 (bf16)
                        + hp * 4 + 4),           # b1, b2 (f32)
    )

    out = pl.pallas_call(
        _two_layer_kernel,
        out_shape=jax.ShapeDtypeStruct((b_pad, 1), x.dtype),
        grid=(b_pad // tile_b,),
        in_specs=[
            pl.BlockSpec((tile_b, F), lambda i: (i, 0)),    # x tile (pipelined)
            pl.BlockSpec((F, hp), lambda i: (0, 0)),        # W1 (resident)
            pl.BlockSpec((1, hp), lambda i: (0, 0)),        # b1 (resident)
            pl.BlockSpec((hp, 1), lambda i: (0, 0)),        # W2 (resident)
            pl.BlockSpec((1, 1), lambda i: (0, 0),
                         memory_space=pltpu.MemorySpace.SMEM),  # b2 scalar
        ],
        out_specs=pl.BlockSpec((tile_b, 1), lambda i: (i, 0)),
        compiler_params=pltpu.CompilerParams(
            dimension_semantics=("parallel",)),
        cost_estimate=cost,
    )(xb, w1p, b1p, w2p, b2)

    return out[:B]


def init_params(key, feat_size, hidden=HIDDEN):
    """Deterministic PyTorch-style (uniform +/- 1/sqrt(fan_in)) init."""
    k1, k2, k3, k4, k5, k6 = jax.random.split(key, 6)
    lim1 = 1.0 / jnp.sqrt(feat_size)
    lim2 = 1.0 / jnp.sqrt(hidden)
    w1 = jax.random.uniform(k1, (feat_size, hidden), jnp.float32, -lim1, lim1)
    b1 = jax.random.uniform(k2, (1, hidden), jnp.float32, -lim1, lim1)
    w2 = jax.random.uniform(k3, (hidden, 1), jnp.float32, -lim2, lim2)
    b2 = jax.random.uniform(k4, (1, 1), jnp.float32, -lim2, lim2)
    # sigma head exists in the module but is unused in forward(); init kept for parity.
    _w_sigma = jax.random.uniform(k5, (hidden, 1), jnp.float32, -lim2, lim2)
    _b_sigma = jax.random.uniform(k6, (1, 1), jnp.float32, -lim2, lim2)
    return w1, b1, w2, b2


if __name__ == "__main__":
    key = jax.random.PRNGKey(0)
    kx, kp = jax.random.split(key)

    # Small demo shapes; batch intentionally not a multiple of 8 to exercise the
    # pad-and-slice tail path.
    batch, feat_size = 12, 32
    x = jax.random.normal(kx, (batch, feat_size), jnp.float32)
    w1, b1, w2, b2 = init_params(kp, feat_size)

    out = jax.block_until_ready(two_layer_net(x, w1, b1, w2, b2))
    assert out.shape == (batch, 1)

    # Tight check against a bf16-input / f32-accumulate reference (mirrors kernel math).
    xq = x.astype(jnp.bfloat16).astype(jnp.float32)
    w1q = w1.astype(jnp.bfloat16).astype(jnp.float32)
    w2q = w2.astype(jnp.bfloat16).astype(jnp.float32)
    h = jnp.maximum(xq @ w1q + b1, 0.0)
    ref_bf16 = h.astype(jnp.bfloat16).astype(jnp.float32) @ w2q + b2
    assert jnp.allclose(out, ref_bf16, atol=1e-3, rtol=1e-3)

    # Loose check against the full-f32 PyTorch-equivalent forward.
    ref_f32 = jnp.maximum(x @ w1 + b1, 0.0) @ w2 + b2
    assert jnp.allclose(out, ref_f32, atol=2e-2, rtol=2e-2)

    print("KERNEL_OK")
</pallas_src>

<mosaic_0001>
module attributes {stable_mosaic.version = 11 : i64} {
  func.func @_two_layer_kernel(%arg0: i32, %arg1: memref<16x32xbf16, #tpu.memory_space<vmem>>, %arg2: memref<32x128xbf16, #tpu.memory_space<vmem>>, %arg3: memref<1x128xf32, #tpu.memory_space<vmem>>, %arg4: memref<128x1xbf16, #tpu.memory_space<vmem>>, %arg5: memref<1x1xf32, #tpu.memory_space<smem>>, %arg6: memref<16x1xf32, #tpu.memory_space<vmem>>) attributes {dimension_semantics = [#tpu.dimension_semantics<parallel>], iteration_bounds = array<i64: 1>, scalar_prefetch = 0 : i64, scratch_operands = 0 : i64, tpu.core_type = #tpu.core_type<tc>, window_params = [{transform_indices = @transform_0, window_bounds = array<i64: 16, 32>}, {pipeline_mode = #tpu.pipeline_mode<synchronous>, transform_indices = @transform_1, window_bounds = array<i64: 32, 128>}, {pipeline_mode = #tpu.pipeline_mode<synchronous>, transform_indices = @transform_2, window_bounds = array<i64: 1, 128>}, {pipeline_mode = #tpu.pipeline_mode<synchronous>, transform_indices = @transform_3, window_bounds = array<i64: 128, 1>}, {transform_indices = @transform_4, window_bounds = array<i64: 1, 1>}, {transform_indices = @transform_5, window_bounds = array<i64: 16, 1>}]} {
    %c0 = arith.constant 0 : index
    %c0_0 = arith.constant 0 : index
    %0 = vector.load %arg1[%c0, %c0_0] : memref<16x32xbf16, #tpu.memory_space<vmem>>, vector<16x32xbf16>
    %c0_1 = arith.constant 0 : index
    %c0_2 = arith.constant 0 : index
    %1 = vector.load %arg2[%c0_1, %c0_2] : memref<32x128xbf16, #tpu.memory_space<vmem>>, vector<32x128xbf16>
    %cst = arith.constant dense<0.000000e+00> : vector<16x128xf32>
    %2 = tpu.matmul %0, %1, %cst {dimension_numbers = #tpu.dot_dimension_numbers<[1], [0], [0], [1], [0, 0, 1, 1], [], []>} : vector<16x32xbf16>, vector<32x128xbf16>, vector<16x128xf32> -> vector<16x128xf32>
    %c0_3 = arith.constant 0 : index
    %c0_4 = arith.constant 0 : index
    %3 = vector.load %arg3[%c0_3, %c0_4] : memref<1x128xf32, #tpu.memory_space<vmem>>, vector<1x128xf32>
    %4 = vector.broadcast %3 : vector<1x128xf32> to vector<16x128xf32>
    %5 = arith.addf %2, %4 : vector<16x128xf32>
    %cst_5 = arith.constant 0.000000e+00 : f32
    %6 = vector.broadcast %cst_5 : f32 to vector<16x128xf32>
    %7 = arith.maximumf %5, %6 : vector<16x128xf32>
    %8 = arith.truncf %7 : vector<16x128xf32> to vector<16x128xbf16>
    %c0_6 = arith.constant 0 : index
    %c0_7 = arith.constant 0 : index
    %9 = vector.load %arg4[%c0_6, %c0_7] : memref<128x1xbf16, #tpu.memory_space<vmem>>, vector<128x1xbf16>
    %cst_8 = arith.constant dense<0.000000e+00> : vector<16x1xf32>
    %10 = tpu.matmul %8, %9, %cst_8 {dimension_numbers = #tpu.dot_dimension_numbers<[1], [0], [0], [1], [0, 0, 1, 1], [], []>} : vector<16x128xbf16>, vector<128x1xbf16>, vector<16x1xf32> -> vector<16x1xf32>
    %c0_9 = arith.constant 0 : index
    %c0_10 = arith.constant 0 : index
    %11 = memref.load %arg5[%c0_9, %c0_10] : memref<1x1xf32, #tpu.memory_space<smem>>
    %12 = vector.broadcast %11 : f32 to vector<16x1xf32>
    %13 = arith.addf %10, %12 : vector<16x1xf32>
    %c0_11 = arith.constant 0 : index
    %c0_12 = arith.constant 0 : index
    %14 = vector.load %arg6[%c0_11, %c0_12] : memref<16x1xf32, #tpu.memory_space<vmem>>, vector<16x1xf32>
    tpu.vector_store %arg6[%c0_11, %c0_12], %13 {strides = array<i32>} : memref<16x1xf32, #tpu.memory_space<vmem>>, vector<16x1xf32>,
    return
  }
  func.func @transform_0(%arg0: i32) -> (i32, i32) {
    %c0_i32 = arith.constant 0 : i32
    %c0_i32_0 = arith.constant 0 : i32
    return %arg0, %c0_i32 : i32, i32
  }
  func.func @transform_1(%arg0: i32) -> (i32, i32) {
    %c0_i32 = arith.constant 0 : i32
    %c0_i32_0 = arith.constant 0 : i32
    %c0_i32_1 = arith.constant 0 : i32
    return %c0_i32, %c0_i32_0 : i32, i32
  }
  func.func @transform_2(%arg0: i32) -> (i32, i32) {
    %c0_i32 = arith.constant 0 : i32
    %c0_i32_0 = arith.constant 0 : i32
    %c0_i32_1 = arith.constant 0 : i32
    return %c0_i32, %c0_i32_0 : i32, i32
  }
  func.func @transform_3(%arg0: i32) -> (i32, i32) {
    %c0_i32 = arith.constant 0 : i32
    %c0_i32_0 = arith.constant 0 : i32
    %c0_i32_1 = arith.constant 0 : i32
    return %c0_i32, %c0_i32_0 : i32, i32
  }
  func.func @transform_4(%arg0: i32) -> (i32, i32) {
    %c0_i32 = arith.constant 0 : i32
    %c0_i32_0 = arith.constant 0 : i32
    %c0_i32_1 = arith.constant 0 : i32
    return %c0_i32, %c0_i32_0 : i32, i32
  }
  func.func @transform_5(%arg0: i32) -> (i32, i32) {
    %c0_i32 = arith.constant 0 : i32
    %c0_i32_0 = arith.constant 0 : i32
    return %arg0, %c0_i32 : i32, i32
  }
}

</mosaic_0001>

<llo_original>
// kernel: tpu_custom_call.1
$region0: #{tpu_custom_call.1}
  #allocation0 [shape = 'u32[]', space=smem, size = 0x4, offset = 0x4, fixed_abs, tag = 'smem constant byte address 0x4 - core index']
  #allocation1 [shape = 'u32[144,128]{1,0:T(1,128)}', space=vmem, size = 0x12000, scoped, tag = 'internal scratch']
  #allocation2 [shape = 'f32[1,1]{1,0:T(1,128)S(6)}', space=smem, size = 0x200, scoped, tag = 'scoped memory for tpu_custom_call.1']
  %s0 = inlined_call_operand.vmem [shape: bf16[16,32], index: 0, kind: input, shape index: {}]
  %s1 = inlined_call_operand.vmem [shape: bf16[32,128], index: 1, kind: input, shape index: {}]
  %s2 = inlined_call_operand.vmem [shape: f32[1,128], index: 2, kind: input, shape index: {}]
  %s3 = inlined_call_operand.vmem [shape: bf16[128,1], index: 3, kind: input, shape index: {}]
  %s4 = inlined_call_operand.<no memory space> [shape: f32[1,1], index: 4, kind: input, shape index: {}]
  %s5 = inlined_call_operand.vmem [shape: f32[16,1], index: 5, kind: output, shape index: {}]
  %s6 = sld [smem:[#allocation0]]
  $region30: #{tpu_custom_call.1} parent=0
    _
  %s8 = ssub.s32 1, %s6
  %s9 = scalar_select 0, %s8, %s6
  %10 = sst [smem:[#allocation2]] %s4
  // Predicated region
  $region2: #{tpu_custom_call.1} parent=0 // pred_check
    _
  $region3: #{tpu_custom_call.1} parent=0 // pred_check_branch
    %12 = sbr.rel (0) target = $region5
  $region4: #{tpu_custom_call.1} parent=0 // pred_region
    _
  $region5: #{tpu_custom_call.1} parent=0 // pred_fallthru
    _
  // Predicated region
  $region6: #{tpu_custom_call.1} parent=0 // pred_check
    _
  $region7: #{tpu_custom_call.1} parent=0 // pred_check_branch
    %14 = sbr.rel (0) target = $region9
  $region8: #{tpu_custom_call.1} parent=0 // pred_region
    _
  $region9: #{tpu_custom_call.1} parent=0 // pred_fallthru
    _
  // Predicated region
  $region10: #{tpu_custom_call.1} parent=0 // pred_check
    _
  $region11: #{tpu_custom_call.1} parent=0 // pred_check_branch
    %16 = sbr.rel (0) target = $region13
  $region12: #{tpu_custom_call.1} parent=0 // pred_region
    _
  $region13: #{tpu_custom_call.1} parent=0 // pred_fallthru
    _
  // Predicated region
  $region14: #{tpu_custom_call.1} parent=0 // pred_check
    _
  $region15: #{tpu_custom_call.1} parent=0 // pred_check_branch
    %18 = sbr.rel (0) target = $region17
  $region16: #{tpu_custom_call.1} parent=0 // pred_region
    _
  $region17: #{tpu_custom_call.1} parent=0 // pred_fallthru
    _
  // Predicated region
  $region18: #{tpu_custom_call.1} parent=0 // pred_check
    _
  $region19: #{tpu_custom_call.1} parent=0 // pred_check_branch
    %20 = sbr.rel (0) target = $region21
  $region20: #{tpu_custom_call.1} parent=0 // pred_region
    _
  $region21: #{tpu_custom_call.1} parent=0 // pred_fallthru
    _
  %v22 = vld [vmem:[%s0] sm:$0xf]
  %v23 = vld [vmem:[%s0 + $0x4] sm:$0xf]
  %v24 = vld [vmem:[%s1] sm:$0xf]
  %v25 = vld [vmem:[%s1 + $0x4] sm:$0xf]
  %v26 = vld [vmem:[%s1 + $0x8] sm:$0xf]
  %v27 = vld [vmem:[%s1 + $0xc] sm:$0xf]
  %v28 = vld [vmem:[%s2] sm:$0x1]
  %v30 = vlaneseq
  %v31 = vshrl.u32 %v30, 7
  %v32 = vsub.s32 0, %v31
  %v33 = vrot.slane %v28, %v32
  %v37 = vunpack.c.l.b16 %v22
  %v38 = vunpack.c.l.b16 %v23
  %v39 = vpack.c.b16 %v38, %v37
  %v44 = vunpack.c.l.b16 %v24
  %v45 = vunpack.c.l.b16 %v25
  %v46 = vunpack.c.l.b16 %v26
  %v47 = vunpack.c.l.b16 %v27
  %v48 = vpack.c.b16 %v45, %v44
  %v49 = vpack.c.b16 %v47, %v46
  %vm52 = vcmask 261120
  %v54 = vsel %vm52, %v39, 0
  %56 = vmatprep.subr.bf16.mxu0 0
  %57 = vmatpush1.bf16.msra.mxu0 0
  %58 = vmatprep.subr.bf16.mxu0 0
  %59 = vmatpush1.bf16.msra.mxu0 0
  %60 = vmatprep.subr.bf16.mxu0 0
  %61 = vmatpush1.bf16.msra.mxu0 0
  %62 = vmatprep.subr.bf16.mxu0 0
  %63 = vmatpush1.bf16.msra.mxu0 0
  %64 = vmatprep.subr.bf16.mxu0 0
  %65 = vmatpush1.bf16.msra.mxu0 0
  %66 = vmatprep.subr.bf16.mxu0 0
  %67 = vmatpush1.bf16.msra.mxu0 0
  %68 = vmatprep.subr.bf16.mxu0 0
  %69 = vmatpush1.bf16.msra.mxu0 %v49
  %70 = vmatprep.subr.bf16.mxu0 0
  %71 = vmatpush1.bf16.msra.mxu0 %v48
  %72 = vmatprep.subr.bf16.mxu0 0
  %73 = vmatpush2.bf16.msra.mxu0 0
  %74 = vmatprep.subr.bf16.mxu0 0
  %75 = vmatpush2.bf16.msra.mxu0 0
  %76 = vmatprep.subr.bf16.mxu0 0
  %77 = vmatpush2.bf16.msra.mxu0 0
  %78 = vmatprep.subr.bf16.mxu0 0
  %79 = vmatpush2.bf16.msra.mxu0 0
  %80 = vmatprep.subr.bf16.mxu0 0
  %81 = vmatpush2.bf16.msra.mxu0 0
  %82 = vmatprep.subr.bf16.mxu0 0
  %83 = vmatpush2.bf16.msra.mxu0 0
  %84 = vmatprep.subr.bf16.mxu0 0
  %85 = vmatpush2.bf16.msra.mxu0 0
  %86 = vmatprep.subr.bf16.mxu0 0
  %87 = vmatpush2.bf16.msra.mxu0 0
  %88 = vmatprep.mubr.bf16.mxu0 0
  %89 = vmatmul.mubr.bf16.gmra.mxu0 %v54
  %v90 = vpop.f32.mrf.mxu0
  %v91 = vadd.f32 %v33, %v90
  %v92 = vpop.f32.mrf.mxu0
  %v93 = vpop.f32.mrf.mxu0
  %v94 = vadd.f32 %v33, %v93
  %v95 = vpop.f32.mrf.mxu0
  %96 = vdwg.mxu0
  %v97 = vmax.f32 %v91, 0.0
  %v98 = vmax.f32 %v94, 0.0
  %v99 = vpack.c.bf16 %v98, %v97
  %v100 = vld [vmem:[%s3] sm:$0xf]
  %v101 = vld [vmem:[%s3 + $0x4] sm:$0xf]
  %v102 = vld [vmem:[%s3 + $0x8] sm:$0xf]
  %v103 = vld [vmem:[%s3 + $0xc] sm:$0xf]
  %v104 = vld [vmem:[%s3 + $0x10] sm:$0xf]
  %v105 = vld [vmem:[%s3 + $0x14] sm:$0xf]
  %v106 = vld [vmem:[%s3 + $0x18] sm:$0xf]
  %v107 = vld [vmem:[%s3 + $0x1c] sm:$0xf]
  %v108 = vld [vmem:[%s3 + $0x20] sm:$0xf]
  %v109 = vld [vmem:[%s3 + $0x24] sm:$0xf]
  %v110 = vld [vmem:[%s3 + $0x28] sm:$0xf]
  %v111 = vld [vmem:[%s3 + $0x2c] sm:$0xf]
  %v112 = vld [vmem:[%s3 + $0x30] sm:$0xf]
  %v113 = vld [vmem:[%s3 + $0x34] sm:$0xf]
  %v114 = vld [vmem:[%s3 + $0x38] sm:$0xf]
  %v115 = vld [vmem:[%s3 + $0x3c] sm:$0xf]
  %s116 = sld [smem:[#allocation2]]
  %v117 = vstv %s116
  %v134 = vunpack.c.l.b16 %v100
  %v135 = vunpack.c.l.b16 %v101
  %v136 = vunpack.c.l.b16 %v102
  %v137 = vunpack.c.l.b16 %v103
  %v138 = vunpack.c.l.b16 %v104
  %v139 = vunpack.c.l.b16 %v105
  %v140 = vunpack.c.l.b16 %v106
  %v141 = vunpack.c.l.b16 %v107
  %v142 = vunpack.c.l.b16 %v108
  %v143 = vunpack.c.l.b16 %v109
  %v144 = vunpack.c.l.b16 %v110
  %v145 = vunpack.c.l.b16 %v111
  %v146 = vunpack.c.l.b16 %v112
  %v147 = vunpack.c.l.b16 %v113
  %v148 = vunpack.c.l.b16 %v114
  %v149 = vunpack.c.l.b16 %v115
  %v150 = vpack.c.b16 %v135, %v134
  %v151 = vpack.c.b16 %v137, %v136
  %v152 = vpack.c.b16 %v139, %v138
  %v153 = vpack.c.b16 %v141, %v140
  %v154 = vpack.c.b16 %v143, %v142
  %v155 = vpack.c.b16 %v145, %v144
  %v156 = vpack.c.b16 %v147, %v146
  %v157 = vpack.c.b16 %v149, %v148
  %166 = vmatprep.subr.bf16.mxu0 0
  %167 = vmatpush1.bf16.msra.mxu0 %v157
  %168 = vmatprep.subr.bf16.mxu0 0
  %169 = vmatpush1.bf16.msra.mxu0 %v156
  %170 = vmatprep.subr.bf16.mxu0 0
  %171 = vmatpush1.bf16.msra.mxu0 %v155
  %172 = vmatprep.subr.bf16.mxu0 0
  %173 = vmatpush1.bf16.msra.mxu0 %v154
  %174 = vmatprep.subr.bf16.mxu0 0
  %175 = vmatpush1.bf16.msra.mxu0 %v153
  %176 = vmatprep.subr.bf16.mxu0 0
  %177 = vmatpush1.bf16.msra.mxu0 %v152
  %178 = vmatprep.subr.bf16.mxu0 0
  %179 = vmatpush1.bf16.msra.mxu0 %v151
  %180 = vmatprep.subr.bf16.mxu0 0
  %181 = vmatpush1.bf16.msra.mxu0 %v150
  %182 = vmatprep.subr.bf16.mxu0 0
  %183 = vmatpush2.bf16.msra.mxu0 0
  %184 = vmatprep.subr.bf16.mxu0 0
  %185 = vmatpush2.bf16.msra.mxu0 0
  %186 = vmatprep.subr.bf16.mxu0 0
  %187 = vmatpush2.bf16.msra.mxu0 0
  %188 = vmatprep.subr.bf16.mxu0 0
  %189 = vmatpush2.bf16.msra.mxu0 0
  %190 = vmatprep.subr.bf16.mxu0 0
  %191 = vmatpush2.bf16.msra.mxu0 0
  %192 = vmatprep.subr.bf16.mxu0 0
  %193 = vmatpush2.bf16.msra.mxu0 0
  %194 = vmatprep.subr.bf16.mxu0 0
  %195 = vmatpush2.bf16.msra.mxu0 0
  %196 = vmatprep.subr.bf16.mxu0 0
  %197 = vmatpush2.bf16.msra.mxu0 0
  %198 = vmatprep.mubr.bf16.mxu0 0
  %199 = vmatmul.mubr.bf16.gmra.mxu0 %v99
  %v200 = vpop.f32.mrf.mxu0
  %v201 = vadd.f32 %v117, %v200
  %v202 = vpop.f32.mrf.mxu0
  %v203 = vpop.f32.mrf.mxu0
  %v204 = vadd.f32 %v117, %v203
  %v205 = vpop.f32.mrf.mxu0
  %206 = vdwg.mxu0
  %vm207 = vcmask 7168
  %208 = vst.msk [vmem:[%s5] sm:$0xff] %vm207, %v201
  %209 = vst.msk [vmem:[%s5 + $0x8] sm:$0xff] %vm207, %v204
  // Predicated region
  $region22: #{tpu_custom_call.1} parent=0 // pred_check
    _
  $region23: #{tpu_custom_call.1} parent=0 // pred_check_branch
    %211 = sbr.rel (0) target = $region25
  $region24: #{tpu_custom_call.1} parent=0 // pred_region
    _
  $region25: #{tpu_custom_call.1} parent=0 // pred_fallthru
    _
  // Predicated region
  $region26: #{tpu_custom_call.1} parent=0 // pred_check
    _
  $region27: #{tpu_custom_call.1} parent=0 // pred_check_branch
    %213 = sbr.rel (0) target = $region29
  $region28: #{tpu_custom_call.1} parent=0 // pred_region
    _
  $region29: #{tpu_custom_call.1} parent=0 // pred_fallthru
    _

</llo_original>
